<compile_context>
chip_gen: v7x
topology: tpu7x:2x2x1
jax: 0.10.0
libtpu: 0.0.40
codegen_flags: <defaults>
</compile_context>

<pallas_src>
import functools
import math

import jax
import jax.numpy as jnp
from jax import lax
from jax.experimental import pallas as pl
from jax.experimental.pallas import tpu as pltpu

# Contract the last axis of both operands (i.e. x @ W.T without materializing .T).
_DN_LAST = (((1,), (1,)), ((), ()))


def _lora_linear_kernel(x_ref, w_ref, b_ref, *rest, use_lora):
    # Ref order: inputs [x, W, bias, (A, B)], outputs [o], scratch [acc, (xa)].
    if use_lora:
        a_ref, b_lora_ref, o_ref, acc_ref, xa_ref = rest
    else:
        o_ref, acc_ref = rest

    j = pl.program_id(1)          # N (out_features) tile
    k = pl.program_id(2)          # K (in_features) reduction tile
    nk = pl.num_programs(2)

    @pl.when(k == 0)
    def _():
        acc_ref[...] = jnp.zeros_like(acc_ref)

    x = x_ref[...]

    # Base linear: x @ W.T, transpose-free (MXU consumes the (out,in) layout).
    acc_ref[...] += lax.dot_general(x, w_ref[...], _DN_LAST,
                                    preferred_element_type=jnp.float32)

    if use_lora:
        # TODO(synk): lora_dropout is a no-op at inference; training-mode dropout
        # (stochastic masking of x) is not implemented here.
        # xa = x @ A.T is computed only while j == 0 and cached in VMEM scratch
        # for all subsequent N tiles of the same M tile.
        @pl.when(jnp.logical_and(j == 0, k == 0))
        def _():
            xa_ref[...] = jnp.zeros_like(xa_ref)

        @pl.when(j == 0)
        def _():
            xa_ref[...] += lax.dot_general(x, a_ref[...], _DN_LAST,
                                           preferred_element_type=jnp.float32)

    @pl.when(k == nk - 1)
    def _():
        out = acc_ref[...] + b_ref[...].astype(jnp.float32)
        if use_lora:
            # lora_B was pre-scaled by `scaling` in the wrapper.
            out = out + lax.dot_general(xa_ref[...],
                                        b_lora_ref[...].astype(jnp.float32),
                                        _DN_LAST,
                                        preferred_element_type=jnp.float32)
        o_ref[...] = out.astype(o_ref.dtype)


def _round_up(v, m):
    return (v + m - 1) // m * m


def _choose_tile(dim, target, align):
    # Large tile when the problem is large, otherwise the whole (aligned) dim.
    return target if dim >= target else _round_up(dim, align)


def _pad_axis(a, axis, new_size):
    pad = new_size - a.shape[axis]
    if pad <= 0:
        return a
    widths = [(0, 0)] * a.ndim
    widths[axis] = (0, pad)
    return jnp.pad(a, widths)


def lora_linear_merge_forward(x, weight, bias, lora_A, lora_B, scaling,
                              lora_mode="route", tm=256, tn=256, tk=512):
    """x: (..., in_features). weight: (out,in). Returns (..., out_features)."""
    orig_shape = x.shape
    in_features = orig_shape[-1]
    out_features = weight.shape[0]
    use_lora = (lora_mode in ("route", "refine", "read")
                and lora_A is not None and lora_B is not None)

    x2 = x.reshape(-1, in_features)
    M = x2.shape[0]

    # Tile selection + padding (lane-dense output: tn is a multiple of 128).
    tm = _choose_tile(M, tm, 8)
    tn = _choose_tile(out_features, tn, 128)
    tk = _choose_tile(in_features, tk, 128)
    Mp = _round_up(M, tm)
    Np = _round_up(out_features, tn)
    Kp = _round_up(in_features, tk)

    x_p = _pad_axis(_pad_axis(x2, 0, Mp), 1, Kp)
    w_p = _pad_axis(_pad_axis(weight, 0, Np), 1, Kp)
    if bias is None:
        bias = jnp.zeros((out_features,), dtype=x.dtype)
    b_p = _pad_axis(bias.reshape(1, out_features), 1, Np)

    grid = (Mp // tm, Np // tn, Kp // tk)

    in_arrays = [x_p, w_p, b_p]
    in_specs = [
        pl.BlockSpec((tm, tk), lambda i, j, k: (i, k)),   # x tile
        pl.BlockSpec((tn, tk), lambda i, j, k: (j, k)),   # W tile (PyTorch (out,in))
        pl.BlockSpec((1, tn), lambda i, j, k: (0, j)),    # bias tile
    ]
    scratch_shapes = [pltpu.VMEM((tm, tn), jnp.float32)]  # f32 accumulator

    if use_lora:
        r = lora_A.shape[0]
        rp = _round_up(r, 8)
        a_p = _pad_axis(_pad_axis(lora_A, 0, rp), 1, Kp)
        # Fold `scaling` into B once (removes a (tm, out) VPU multiply per tile).
        b_scaled = lora_B * jnp.asarray(scaling, dtype=lora_B.dtype)
        bm_p = _pad_axis(_pad_axis(b_scaled, 0, Np), 1, rp)
        in_arrays += [a_p, bm_p]
        in_specs += [
            pl.BlockSpec((rp, tk), lambda i, j, k: (0, k)),  # lora_A
            pl.BlockSpec((tn, rp), lambda i, j, k: (j, 0)),  # lora_B (pre-scaled)
        ]
        scratch_shapes.append(pltpu.VMEM((tm, rp), jnp.float32))  # cached x @ A.T

    kernel = functools.partial(_lora_linear_kernel, use_lora=use_lora)

    # With LoRA, the cached xa scratch is written at j == 0 and reused for
    # j > 0, so the N axis must stay "arbitrary"; megacore parallelism comes
    # from the M axis. Without LoRA, both M and N are parallel.
    dim_sem = (("parallel", "arbitrary", "arbitrary") if use_lora
               else ("parallel", "parallel", "arbitrary"))

    out = pl.pallas_call(
        kernel,
        out_shape=jax.ShapeDtypeStruct((Mp, Np), x.dtype),
        grid_spec=pltpu.PrefetchScalarGridSpec(
            num_scalar_prefetch=0,
            grid=grid,
            in_specs=in_specs,
            out_specs=pl.BlockSpec((tm, tn), lambda i, j, k: (i, j)),
            scratch_shapes=scratch_shapes,
        ),
        compiler_params=pltpu.CompilerParams(
            dimension_semantics=dim_sem,
            vmem_limit_bytes=32 * 1024 * 1024,   # safe on v5e/v6e/v7x
        ),
    )(*in_arrays)

    out = out[:M, :out_features]
    return out.reshape(*orig_shape[:-1], out_features)


def _reference(x, weight, bias, lora_A, lora_B, scaling, lora_mode):
    y = x @ weight.T + bias
    if lora_mode in ("route", "refine", "read"):
        y = y + (x @ lora_A.T) @ lora_B.T * scaling
    return y


if __name__ == "__main__":
    # Small shapes consistent with the module: nn.Linear(in=32, out=32), r=32.
    batch, seq = 2, 8
    in_features, out_features = 32, 32
    r = 32
    lora_alpha = 32
    scaling = lora_alpha / r

    key = jax.random.PRNGKey(0)
    kx, kw, kb, ka, kbm = jax.random.split(key, 5)

    x = jax.random.normal(kx, (batch, seq, in_features), dtype=jnp.float32)

    # Base linear params (deterministic, Linear-like uniform init).
    w_bound = 1.0 / math.sqrt(in_features)
    weight = jax.random.uniform(kw, (out_features, in_features),
                                minval=-w_bound, maxval=w_bound, dtype=jnp.float32)
    bias = jax.random.uniform(kb, (out_features,),
                              minval=-w_bound, maxval=w_bound, dtype=jnp.float32)

    # LoRA params. Module init zeros lora_B (making LoRA a no-op); use random
    # values so the LoRA path is actually exercised.
    a_bound = 1.0 / math.sqrt(in_features)  # kaiming_uniform(a=sqrt(5)) bound
    lora_A = jax.random.uniform(ka, (r, in_features),
                                minval=-a_bound, maxval=a_bound, dtype=jnp.float32)
    lora_B = jax.random.uniform(kbm, (out_features, r),
                                minval=-a_bound, maxval=a_bound, dtype=jnp.float32)

    # LoRA-enabled path ('route'; 'refine'/'read' just use a different A/B pair).
    out = lora_linear_merge_forward(x, weight, bias, lora_A, lora_B, scaling,
                                    lora_mode="route")
    out = jax.block_until_ready(out)
    ref = _reference(x, weight, bias, lora_A, lora_B, scaling, "route")
    assert out.shape == (batch, seq, out_features)
    assert jnp.allclose(out, ref, atol=1e-4, rtol=1e-4), "mismatch vs reference (lora)"

    # Base-only path (lora_mode=None): A/B are not even DMA'd.
    out2 = lora_linear_merge_forward(x, weight, bias, None, None, scaling,
                                     lora_mode=None)
    out2 = jax.block_until_ready(out2)
    ref2 = _reference(x, weight, bias, lora_A, lora_B, scaling, None)
    assert jnp.allclose(out2, ref2, atol=1e-4, rtol=1e-4), "mismatch vs reference (base)"

    print("KERNEL_OK")
</pallas_src>

<mosaic_0001>
module attributes {stable_mosaic.version = 11 : i64} {
  func.func @_lora_linear_kernel(%arg0: i32, %arg1: i32, %arg2: i32, %arg3: memref<16x128xf32, #tpu.memory_space<vmem>>, %arg4: memref<128x128xf32, #tpu.memory_space<vmem>>, %arg5: memref<1x128xf32, #tpu.memory_space<vmem>>, %arg6: memref<32x128xf32, #tpu.memory_space<vmem>>, %arg7: memref<128x32xf32, #tpu.memory_space<vmem>>, %arg8: memref<16x128xf32, #tpu.memory_space<vmem>>, %arg9: memref<16x128xf32, #tpu.memory_space<vmem>>, %arg10: memref<16x32xf32, #tpu.memory_space<vmem>>) attributes {dimension_semantics = [#tpu.dimension_semantics<parallel>, #tpu.dimension_semantics<arbitrary>, #tpu.dimension_semantics<arbitrary>], iteration_bounds = array<i64: 1, 1, 1>, scalar_prefetch = 0 : i64, scratch_operands = 2 : i64, tpu.core_type = #tpu.core_type<tc>, window_params = [{transform_indices = @transform_0, window_bounds = array<i64: 16, 128>}, {transform_indices = @transform_1, window_bounds = array<i64: 128, 128>}, {transform_indices = @transform_2, window_bounds = array<i64: 1, 128>}, {transform_indices = @transform_3, window_bounds = array<i64: 32, 128>}, {transform_indices = @transform_4, window_bounds = array<i64: 128, 32>}, {transform_indices = @transform_5, window_bounds = array<i64: 16, 128>}]} {
    %c0_i32 = arith.constant 0 : i32
    %0 = arith.cmpi eq, %arg2, %c0_i32 : i32
    %1 = arith.extui %0 : i1 to i32
    %c0_i32_0 = arith.constant 0 : i32
    %2 = arith.cmpi ne, %1, %c0_i32_0 : i32
    scf.if %2 {
      %cst_15 = arith.constant 0.000000e+00 : f32
      %20 = vector.broadcast %cst_15 : f32 to vector<16x128xf32>
      %c0_16 = arith.constant 0 : index
      %c0_17 = arith.constant 0 : index
      %21 = vector.load %arg9[%c0_16, %c0_17] : memref<16x128xf32, #tpu.memory_space<vmem>>, vector<16x128xf32>
      tpu.vector_store %arg9[%c0_16, %c0_17], %20 {strides = array<i32>} : memref<16x128xf32, #tpu.memory_space<vmem>>, vector<16x128xf32>,
    } else {
    }
    %c0 = arith.constant 0 : index
    %c0_1 = arith.constant 0 : index
    %3 = vector.load %arg3[%c0, %c0_1] : memref<16x128xf32, #tpu.memory_space<vmem>>, vector<16x128xf32>
    %c0_2 = arith.constant 0 : index
    %c0_3 = arith.constant 0 : index
    %4 = vector.load %arg9[%c0_2, %c0_3] : memref<16x128xf32, #tpu.memory_space<vmem>>, vector<16x128xf32>
    %c0_4 = arith.constant 0 : index
    %c0_5 = arith.constant 0 : index
    %5 = vector.load %arg4[%c0_4, %c0_5] : memref<128x128xf32, #tpu.memory_space<vmem>>, vector<128x128xf32>
    %cst = arith.constant dense<0.000000e+00> : vector<16x128xf32>
    %6 = tpu.matmul %3, %5, %cst {dimension_numbers = #tpu.dot_dimension_numbers<[1], [1], [0], [0], [0, 0, 1, 0], [], []>} : vector<16x128xf32>, vector<128x128xf32>, vector<16x128xf32> -> vector<16x128xf32>
    %7 = arith.addf %4, %6 : vector<16x128xf32>
    %c0_6 = arith.constant 0 : index
    %c0_7 = arith.constant 0 : index
    %8 = vector.load %arg9[%c0_6, %c0_7] : memref<16x128xf32, #tpu.memory_space<vmem>>, vector<16x128xf32>
    tpu.vector_store %arg9[%c0_6, %c0_7], %7 {strides = array<i32>} : memref<16x128xf32, #tpu.memory_space<vmem>>, vector<16x128xf32>,
    %c0_i32_8 = arith.constant 0 : i32
    %9 = arith.cmpi eq, %arg1, %c0_i32_8 : i32
    %c0_i32_9 = arith.constant 0 : i32
    %10 = arith.cmpi eq, %arg2, %c0_i32_9 : i32
    %11 = arith.andi %9, %10 : i1
    %12 = arith.extui %11 : i1 to i32
    %c0_i32_10 = arith.constant 0 : i32
    %13 = arith.cmpi ne, %12, %c0_i32_10 : i32
    scf.if %13 {
      %cst_15 = arith.constant 0.000000e+00 : f32
      %20 = vector.broadcast %cst_15 : f32 to vector<16x32xf32>
      %c0_16 = arith.constant 0 : index
      %c0_17 = arith.constant 0 : index
      %21 = vector.load %arg10[%c0_16, %c0_17] : memref<16x32xf32, #tpu.memory_space<vmem>>, vector<16x32xf32>
      tpu.vector_store %arg10[%c0_16, %c0_17], %20 {strides = array<i32>} : memref<16x32xf32, #tpu.memory_space<vmem>>, vector<16x32xf32>,
    } else {
    }
    %c0_i32_11 = arith.constant 0 : i32
    %14 = arith.cmpi eq, %arg1, %c0_i32_11 : i32
    %15 = arith.extui %14 : i1 to i32
    %c0_i32_12 = arith.constant 0 : i32
    %16 = arith.cmpi ne, %15, %c0_i32_12 : i32
    scf.if %16 {
      %c0_15 = arith.constant 0 : index
      %c0_16 = arith.constant 0 : index
      %20 = vector.load %arg10[%c0_15, %c0_16] : memref<16x32xf32, #tpu.memory_space<vmem>>, vector<16x32xf32>
      %c0_17 = arith.constant 0 : index
      %c0_18 = arith.constant 0 : index
      %21 = vector.load %arg6[%c0_17, %c0_18] : memref<32x128xf32, #tpu.memory_space<vmem>>, vector<32x128xf32>
      %cst_19 = arith.constant dense<0.000000e+00> : vector<16x32xf32>
      %22 = tpu.matmul %3, %21, %cst_19 {dimension_numbers = #tpu.dot_dimension_numbers<[1], [1], [0], [0], [0, 0, 1, 0], [], []>} : vector<16x128xf32>, vector<32x128xf32>, vector<16x32xf32> -> vector<16x32xf32>
      %23 = arith.addf %20, %22 : vector<16x32xf32>
      %c0_20 = arith.constant 0 : index
      %c0_21 = arith.constant 0 : index
      %24 = vector.load %arg10[%c0_20, %c0_21] : memref<16x32xf32, #tpu.memory_space<vmem>>, vector<16x32xf32>
      tpu.vector_store %arg10[%c0_20, %c0_21], %23 {strides = array<i32>} : memref<16x32xf32, #tpu.memory_space<vmem>>, vector<16x32xf32>,
    } else {
    }
    %c0_i32_13 = arith.constant 0 : i32
    %17 = arith.cmpi eq, %arg2, %c0_i32_13 : i32
    %18 = arith.extui %17 : i1 to i32
    %c0_i32_14 = arith.constant 0 : i32
    %19 = arith.cmpi ne, %18, %c0_i32_14 : i32
    scf.if %19 {
      %c0_15 = arith.constant 0 : index
      %c0_16 = arith.constant 0 : index
      %20 = vector.load %arg9[%c0_15, %c0_16] : memref<16x128xf32, #tpu.memory_space<vmem>>, vector<16x128xf32>
      %c0_17 = arith.constant 0 : index
      %c0_18 = arith.constant 0 : index
      %21 = vector.load %arg5[%c0_17, %c0_18] : memref<1x128xf32, #tpu.memory_space<vmem>>, vector<1x128xf32>
      %22 = vector.broadcast %21 : vector<1x128xf32> to vector<16x128xf32>
      %23 = arith.addf %20, %22 : vector<16x128xf32>
      %c0_19 = arith.constant 0 : index
      %c0_20 = arith.constant 0 : index
      %24 = vector.load %arg10[%c0_19, %c0_20] : memref<16x32xf32, #tpu.memory_space<vmem>>, vector<16x32xf32>
      %c0_21 = arith.constant 0 : index
      %c0_22 = arith.constant 0 : index
      %25 = vector.load %arg7[%c0_21, %c0_22] : memref<128x32xf32, #tpu.memory_space<vmem>>, vector<128x32xf32>
      %cst_23 = arith.constant dense<0.000000e+00> : vector<16x128xf32>
      %26 = tpu.matmul %24, %25, %cst_23 {dimension_numbers = #tpu.dot_dimension_numbers<[1], [1], [0], [0], [0, 0, 1, 0], [], []>} : vector<16x32xf32>, vector<128x32xf32>, vector<16x128xf32> -> vector<16x128xf32>
      %27 = arith.addf %23, %26 : vector<16x128xf32>
      %c0_24 = arith.constant 0 : index
      %c0_25 = arith.constant 0 : index
      %28 = vector.load %arg8[%c0_24, %c0_25] : memref<16x128xf32, #tpu.memory_space<vmem>>, vector<16x128xf32>
      tpu.vector_store %arg8[%c0_24, %c0_25], %27 {strides = array<i32>} : memref<16x128xf32, #tpu.memory_space<vmem>>, vector<16x128xf32>,
    } else {
    }
    return
  }
  func.func @transform_0(%arg0: i32, %arg1: i32, %arg2: i32) -> (i32, i32) {
    %c0_i32 = arith.constant 0 : i32
    return %arg0, %arg2 : i32, i32
  }
  func.func @transform_1(%arg0: i32, %arg1: i32, %arg2: i32) -> (i32, i32) {
    %c0_i32 = arith.constant 0 : i32
    return %arg1, %arg2 : i32, i32
  }
  func.func @transform_2(%arg0: i32, %arg1: i32, %arg2: i32) -> (i32, i32) {
    %c0_i32 = arith.constant 0 : i32
    %c0_i32_0 = arith.constant 0 : i32
    return %c0_i32, %arg1 : i32, i32
  }
  func.func @transform_3(%arg0: i32, %arg1: i32, %arg2: i32) -> (i32, i32) {
    %c0_i32 = arith.constant 0 : i32
    %c0_i32_0 = arith.constant 0 : i32
    return %c0_i32, %arg2 : i32, i32
  }
  func.func @transform_4(%arg0: i32, %arg1: i32, %arg2: i32) -> (i32, i32) {
    %c0_i32 = arith.constant 0 : i32
    %c0_i32_0 = arith.constant 0 : i32
    return %arg1, %c0_i32 : i32, i32
  }
  func.func @transform_5(%arg0: i32, %arg1: i32, %arg2: i32) -> (i32, i32) {
    %c0_i32 = arith.constant 0 : i32
    return %arg0, %arg1 : i32, i32
  }
}

</mosaic_0001>

<llo_original>
// kernel: tpu_custom_call.1
$region0: #{tpu_custom_call.1}
  #allocation0 [shape = 'u32[]', space=smem, size = 0x4, offset = 0x4, fixed_abs, tag = 'smem constant byte address 0x4 - core index']
  #allocation1 [shape = 'u32[144,128]{1,0:T(1,128)}', space=vmem, size = 0x12000, scoped, tag = 'internal scratch']
  #allocation2 [shape = 'f32[16,128]{1,0:T(8,128)}', space=vmem, size = 0x2000, scoped, tag = 'scratch operand']
  #allocation3 [shape = 'f32[16,32]{1,0:T(8,128)}', space=vmem, size = 0x2000, scoped, tag = 'scratch operand']
  %s0 = inlined_call_operand.hbm [shape: f32[16,128], index: 0, kind: input, shape index: {}]
  %s1 = inlined_call_operand.vmem [shape: f32[128,128], index: 1, kind: input, shape index: {}]
  %s2 = inlined_call_operand.vmem [shape: f32[1,128], index: 2, kind: input, shape index: {}]
  %s3 = inlined_call_operand.vmem [shape: f32[32,128], index: 3, kind: input, shape index: {}]
  %s4 = inlined_call_operand.vmem [shape: f32[128,32], index: 4, kind: input, shape index: {}]
  %s5 = inlined_call_operand.hbm [shape: f32[16,128], index: 5, kind: output, shape index: {}]
  %s6 = sld [smem:[#allocation0]]
  $region50: #{tpu_custom_call.1} parent=0
    _
  %s8 = ssub.s32 1, %s6
  %s9 = scalar_select 0, %s8, %s6
  $region1: #{tpu_custom_call.1} parent=0
    #allocation4 [shape = 'u8[8192]{0}', space=vmem, size = 0x2000, scoped, tag = 'input window, operand 0, single buffered']
    #allocation5 [shape = 's32[1]{0}', space=sflag, size = 0x4, scoped, tag = 'scoped memory for tpu_custom_call.1']
    #allocation6 [shape = 's32[1]{0}', space=sflag, size = 0x4, scoped, tag = 'scoped memory for tpu_custom_call.1']
    #allocation7 [shape = 'u8[8192]{0}', space=vmem, size = 0x2000, scoped, tag = 'output window, operand 0, single buffered']
    %10 = vsyncpa [#allocation5], 0
    %11 = vsyncpa [#allocation6], 0
    // Predicated region
    $region2: #{tpu_custom_call.1} parent=1 // pred_check
      _
    $region3: #{tpu_custom_call.1} parent=1 // pred_check_branch
      %13 = sbr.rel (0) target = $region5
    $region4: #{tpu_custom_call.1} parent=1 // pred_region
      %s15 = ssub.s32 256, 256
      %16 = vsyncadd [#allocation5], %s15
      %s17 = sshll.u32 [#allocation4], 4
      %s18 = int_to_ptr.vmem [resolvable:$true] %s17
      %23 = dma.hbm_to_vmem [thread:$0]  %s0, 256, %s18, [#allocation5], 128, 128, 8
    $region5: #{tpu_custom_call.1} parent=1 // pred_fallthru
      _
    // Predicated region
    $region6: #{tpu_custom_call.1} parent=1 // pred_check
      _
    $region7: #{tpu_custom_call.1} parent=1 // pred_check_branch
      %25 = sbr.rel (0) target = $region9
    $region8: #{tpu_custom_call.1} parent=1 // pred_region
      _
    $region9: #{tpu_custom_call.1} parent=1 // pred_fallthru
      _
    // Predicated region
    $region10: #{tpu_custom_call.1} parent=1 // pred_check
      _
    $region11: #{tpu_custom_call.1} parent=1 // pred_check_branch
      %27 = sbr.rel (0) target = $region13
    $region12: #{tpu_custom_call.1} parent=1 // pred_region
      _
    $region13: #{tpu_custom_call.1} parent=1 // pred_fallthru
      _
    // Predicated region
    $region14: #{tpu_custom_call.1} parent=1 // pred_check
      _
    $region15: #{tpu_custom_call.1} parent=1 // pred_check_branch
      %29 = sbr.rel (0) target = $region17
    $region16: #{tpu_custom_call.1} parent=1 // pred_region
      _
    $region17: #{tpu_custom_call.1} parent=1 // pred_fallthru
      _
    // Predicated region
    $region18: #{tpu_custom_call.1} parent=1 // pred_check
      _
    $region19: #{tpu_custom_call.1} parent=1 // pred_check_branch
      %31 = sbr.rel (0) target = $region21
    $region20: #{tpu_custom_call.1} parent=1 // pred_region
      _
    $region21: #{tpu_custom_call.1} parent=1 // pred_fallthru
      _
    // Predicated region
    $region22: #{tpu_custom_call.1} parent=1 // pred_check
      _
    $region23: #{tpu_custom_call.1} parent=1 // pred_check_branch
      %33 = sbr.rel (0) target = $region25
    $region24: #{tpu_custom_call.1} parent=1 // pred_region
      %34 = dma.done [#allocation5], 256
    $region25: #{tpu_custom_call.1} parent=1 // pred_fallthru
      _
    %p35 = scmp.eq.s32.totalorder 0, 0
    // Predicated region
    $region26: #{tpu_custom_call.1} parent=1 // pred_check
      %p36 = pneg %p35
    $region27: #{tpu_custom_call.1} parent=1 // pred_check_branch
      %38 = sbr.rel (%p36) target = $region29
    $region28: #{tpu_custom_call.1} parent=1 // pred_region
      %39 = vst [vmem:[#allocation2] sm:$0xff] 0.0
      %40 = vst [vmem:[#allocation2 + $0x8] sm:$0xff] 0.0
    $region29: #{tpu_custom_call.1} parent=1 // pred_fallthru
      _
    %v41 = vld [vmem:[#allocation4] sm:$0xff]
    %v42 = vld [vmem:[#allocation4 + $0x8] sm:$0xff]
    %v43 = vld [vmem:[#allocation2] sm:$0xff]
    %v44 = vld [vmem:[#allocation2 + $0x8] sm:$0xff]
    %v45 = vld [vmem:[%s1] sm:$0xff]
    %v46 = vld [vmem:[%s1 + $0x8] sm:$0xff]
    %v47 = vld [vmem:[%s1 + $0x10] sm:$0xff]
    %v48 = vld [vmem:[%s1 + $0x18] sm:$0xff]
    %v49 = vld [vmem:[%s1 + $0x20] sm:$0xff]
    %v50 = vld [vmem:[%s1 + $0x28] sm:$0xff]
    %v51 = vld [vmem:[%s1 + $0x30] sm:$0xff]
    %v52 = vld [vmem:[%s1 + $0x38] sm:$0xff]
    %v53 = vld [vmem:[%s1 + $0x40] sm:$0xff]
    %v54 = vld [vmem:[%s1 + $0x48] sm:$0xff]
    %v55 = vld [vmem:[%s1 + $0x50] sm:$0xff]
    %v56 = vld [vmem:[%s1 + $0x58] sm:$0xff]
    %v57 = vld [vmem:[%s1 + $0x60] sm:$0xff]
    %v58 = vld [vmem:[%s1 + $0x68] sm:$0xff]
    %v59 = vld [vmem:[%s1 + $0x70] sm:$0xff]
    %v60 = vld [vmem:[%s1 + $0x78] sm:$0xff]
    %61 = vmatprep.subr.mxu0 0.0
    %62 = vmatpush1.xpose.msra.mxu0 %v45
    %63 = vmatprep.subr.mxu0 0.0
    %64 = vmatpush1.xpose.msra.mxu0 %v46
    %65 = vmatprep.subr.mxu0 0.0
    %66 = vmatpush1.xpose.msra.mxu0 %v47
    %67 = vmatprep.subr.mxu0 0.0
    %68 = vmatpush1.xpose.msra.mxu0 %v48
    %69 = vmatprep.subr.mxu0 0.0
    %70 = vmatpush1.xpose.msra.mxu0 %v49
    %71 = vmatprep.subr.mxu0 0.0
    %72 = vmatpush1.xpose.msra.mxu0 %v50
    %73 = vmatprep.subr.mxu0 0.0
    %74 = vmatpush1.xpose.msra.mxu0 %v51
    %75 = vmatprep.subr.mxu0 0.0
    %76 = vmatpush1.xpose.msra.mxu0 %v52
    %77 = vmatprep.subr.mxu0 0.0
    %78 = vmatpush1.xpose.msra.mxu0 %v53
    %79 = vmatprep.subr.mxu0 0.0
    %80 = vmatpush1.xpose.msra.mxu0 %v54
    %81 = vmatprep.subr.mxu0 0.0
    %82 = vmatpush1.xpose.msra.mxu0 %v55
    %83 = vmatprep.subr.mxu0 0.0
    %84 = vmatpush1.xpose.msra.mxu0 %v56
    %85 = vmatprep.subr.mxu0 0.0
    %86 = vmatpush1.xpose.msra.mxu0 %v57
    %87 = vmatprep.subr.mxu0 0.0
    %88 = vmatpush1.xpose.msra.mxu0 %v58
    %89 = vmatprep.subr.mxu0 0.0
    %90 = vmatpush1.xpose.msra.mxu0 %v59
    %91 = vmatprep.subr.mxu0 0.0
    %92 = vmatpush1.xpose.msra.mxu0 %v60
    %93 = vmatprep.subr.mxu0 0.0
    %94 = vmatpush1.xpose.msra.mxu0 0.0
    %95 = vmatprep.subr.mxu0 0.0
    %96 = vmatpush1.xpose.msra.mxu0 0.0
    %97 = vmatprep.subr.mxu0 0.0
    %98 = vmatpush1.xpose.msra.mxu0 0.0
    %99 = vmatprep.subr.mxu0 0.0
    %100 = vmatpush1.xpose.msra.mxu0 0.0
    %101 = vmatprep.subr.mxu0 0.0
    %102 = vmatpush1.xpose.msra.mxu0 0.0
    %103 = vmatprep.subr.mxu0 0.0
    %104 = vmatpush1.xpose.msra.mxu0 0.0
    %105 = vmatprep.subr.mxu0 0.0
    %106 = vmatpush1.xpose.msra.mxu0 0.0
    %107 = vmatprep.subr.mxu0 0.0
    %108 = vmatpush1.xpose.msra.mxu0 0.0
    %109 = vmatprep.subr.mxu0 0.0
    %110 = vmatpush1.xpose.msra.mxu0 0.0
    %111 = vmatprep.subr.mxu0 0.0
    %112 = vmatpush1.xpose.msra.mxu0 0.0
    %113 = vmatprep.subr.mxu0 0.0
    %114 = vmatpush1.xpose.msra.mxu0 0.0
    %115 = vmatprep.subr.mxu0 0.0
    %116 = vmatpush1.xpose.msra.mxu0 0.0
    %117 = vmatprep.subr.mxu0 0.0
    %118 = vmatpush1.xpose.msra.mxu0 0.0
    %119 = vmatprep.subr.mxu0 0.0
    %120 = vmatpush1.xpose.msra.mxu0 0.0
    %121 = vmatprep.subr.mxu0 0.0
    %122 = vmatpush1.xpose.msra.mxu0 0.0
    %123 = vmatprep.subr.mxu0 0.0
    %124 = vmatpush1.xpose.msra.mxu0 0.0
    %125 = vmatprep.mubr.f32.mxu0 0.0
    %126 = vmatmul.mubr.f32.gmra.mrb[0].mxu0 %v41
    %v127 = vpop.f32.mrb[0].mxu0
    %v128 = vadd.f32 0.0, %v127
    %v129 = vpop.f32.mrb[0].mxu0
    %130 = vmatprep.mubr.f32.mxu0 0.0
    %131 = vmatmul.mubr.f32.gmra.mrb[0].mxu0 %v42
    %v132 = vpop.f32.mrb[0].mxu0
    %v133 = vadd.f32 0.0, %v132
    %v134 = vpop.f32.mrb[0].mxu0
    %135 = vdwg.mxu0
    %v136 = vadd.f32 %v43, %v128
    %v137 = vadd.f32 %v44, %v133
    %138 = vst [vmem:[#allocation2] sm:$0xff] %v136
    %139 = vst [vmem:[#allocation2 + $0x8] sm:$0xff] %v137
    %p140 = scmp.eq.s32.totalorder 0, 0
    %p141 = pnand %p140, %p35
    %p142 = pneg %p141
    // Predicated region
    $region30: #{tpu_custom_call.1} parent=1 // pred_check
      _
    $region31: #{tpu_custom_call.1} parent=1 // pred_check_branch
      %144 = sbr.rel (%p141) target = $region33
    $region32: #{tpu_custom_call.1} parent=1 // pred_region
      %vm145 = vcmask 261120
      %146 = vst.msk [vmem:[#allocation3] sm:$0xff] %vm145, 0.0
      %147 = vst.msk [vmem:[#allocation3 + $0x8] sm:$0xff] %vm145, 0.0
    $region33: #{tpu_custom_call.1} parent=1 // pred_fallthru
      _
    // Predicated region
    $region34: #{tpu_custom_call.1} parent=1 // pred_check
      %p148 = pneg %p140
    $region35: #{tpu_custom_call.1} parent=1 // pred_check_branch
      %150 = sbr.rel (%p148) target = $region37
    $region36: #{tpu_custom_call.1} parent=1 // pred_region
      %v151 = vld [vmem:[#allocation3] sm:$0xff]
      %v152 = vld [vmem:[#allocation3 + $0x8] sm:$0xff]
      %v153 = vld [vmem:[%s3] sm:$0xff]
      %v154 = vld [vmem:[%s3 + $0x8] sm:$0xff]
      %v155 = vld [vmem:[%s3 + $0x10] sm:$0xff]
      %v156 = vld [vmem:[%s3 + $0x18] sm:$0xff]
      %157 = vmatprep.subr.mxu0 0.0
      %158 = vmatpush1.xpose.msra.mxu0 %v153
      %159 = vmatprep.subr.mxu0 0.0
      %160 = vmatpush1.xpose.msra.mxu0 %v154
      %161 = vmatprep.subr.mxu0 0.0
      %162 = vmatpush1.xpose.msra.mxu0 %v155
      %163 = vmatprep.subr.mxu0 0.0
      %164 = vmatpush1.xpose.msra.mxu0 %v156
      %165 = vmatprep.subr.mxu0 0.0
      %166 = vmatpush1.xpose.msra.mxu0 0.0
      %167 = vmatprep.subr.mxu0 0.0
      %168 = vmatpush1.xpose.msra.mxu0 0.0
      %169 = vmatprep.subr.mxu0 0.0
      %170 = vmatpush1.xpose.msra.mxu0 0.0
      %171 = vmatprep.subr.mxu0 0.0
      %172 = vmatpush1.xpose.msra.mxu0 0.0
      %173 = vmatprep.subr.mxu0 0.0
      %174 = vmatpush1.xpose.msra.mxu0 0.0
      %175 = vmatprep.subr.mxu0 0.0
      %176 = vmatpush1.xpose.msra.mxu0 0.0
      %177 = vmatprep.subr.mxu0 0.0
      %178 = vmatpush1.xpose.msra.mxu0 0.0
      %179 = vmatprep.subr.mxu0 0.0
      %180 = vmatpush1.xpose.msra.mxu0 0.0
      %181 = vmatprep.subr.mxu0 0.0
      %182 = vmatpush1.xpose.msra.mxu0 0.0
      %183 = vmatprep.subr.mxu0 0.0
      %184 = vmatpush1.xpose.msra.mxu0 0.0
      %185 = vmatprep.subr.mxu0 0.0
      %186 = vmatpush1.xpose.msra.mxu0 0.0
      %187 = vmatprep.subr.mxu0 0.0
      %188 = vmatpush1.xpose.msra.mxu0 0.0
      %189 = vmatprep.subr.mxu0 0.0
      %190 = vmatpush1.xpose.msra.mxu0 0.0
      %191 = vmatprep.subr.mxu0 0.0
      %192 = vmatpush1.xpose.msra.mxu0 0.0
      %193 = vmatprep.subr.mxu0 0.0
      %194 = vmatpush1.xpose.msra.mxu0 0.0
      %195 = vmatprep.subr.mxu0 0.0
      %196 = vmatpush1.xpose.msra.mxu0 0.0
      %197 = vmatprep.subr.mxu0 0.0
      %198 = vmatpush1.xpose.msra.mxu0 0.0
      %199 = vmatprep.subr.mxu0 0.0
      %200 = vmatpush1.xpose.msra.mxu0 0.0
      %201 = vmatprep.subr.mxu0 0.0
      %202 = vmatpush1.xpose.msra.mxu0 0.0
      %203 = vmatprep.subr.mxu0 0.0
      %204 = vmatpush1.xpose.msra.mxu0 0.0
      %205 = vmatprep.subr.mxu0 0.0
      %206 = vmatpush1.xpose.msra.mxu0 0.0
      %207 = vmatprep.subr.mxu0 0.0
      %208 = vmatpush1.xpose.msra.mxu0 0.0
      %209 = vmatprep.subr.mxu0 0.0
      %210 = vmatpush1.xpose.msra.mxu0 0.0
      %211 = vmatprep.subr.mxu0 0.0
      %212 = vmatpush1.xpose.msra.mxu0 0.0
      %213 = vmatprep.subr.mxu0 0.0
      %214 = vmatpush1.xpose.msra.mxu0 0.0
      %215 = vmatprep.subr.mxu0 0.0
      %216 = vmatpush1.xpose.msra.mxu0 0.0
      %217 = vmatprep.subr.mxu0 0.0
      %218 = vmatpush1.xpose.msra.mxu0 0.0
      %219 = vmatprep.subr.mxu0 0.0
      %220 = vmatpush1.xpose.msra.mxu0 0.0
      %221 = vmatprep.mubr.f32.mxu0 0.0
      %222 = vmatmul.mubr.f32.gmra.mrb[0].mxu0 %v41
      %v223 = vpop.f32.mrb[0].mxu0
      %v224 = vadd.f32 0.0, %v223
      %v225 = vpop.f32.mrb[0].mxu0
      %226 = vmatprep.mubr.f32.mxu0 0.0
      %227 = vmatmul.mubr.f32.gmra.mrb[0].mxu0 %v42
      %v228 = vpop.f32.mrb[0].mxu0
      %v229 = vadd.f32 0.0, %v228
      %v230 = vpop.f32.mrb[0].mxu0
      %231 = vdwg.mxu0
      %v232 = vadd.f32 %v151, %v224
      %v233 = vadd.f32 %v152, %v229
      %vm234 = vcmask 261120
      %235 = vst.msk [vmem:[#allocation3] sm:$0xff] %vm234, %v232
      %236 = vst.msk [vmem:[#allocation3 + $0x8] sm:$0xff] %vm234, %v233
    $region37: #{tpu_custom_call.1} parent=1 // pred_fallthru
      _
    // Predicated region
    $region38: #{tpu_custom_call.1} parent=1 // pred_check
      %p237 = pneg %p35
    $region39: #{tpu_custom_call.1} parent=1 // pred_check_branch
      %239 = sbr.rel (%p237) target = $region41
    $region40: #{tpu_custom_call.1} parent=1 // pred_region
      %v240 = vld [vmem:[#allocation2] sm:$0xff]
      %v241 = vld [vmem:[#allocation2 + $0x8] sm:$0xff]
      %v242 = vld [vmem:[%s2] sm:$0x1]
      %v244 = vlaneseq
      %v245 = vshrl.u32 %v244, 7
      %v246 = vsub.s32 0, %v245
      %v247 = vrot.slane %v242, %v246
      %v249 = vadd.f32 %v240, %v247
      %v250 = vadd.f32 %v241, %v247
      %v251 = vld [vmem:[#allocation3] sm:$0xff]
      %v252 = vld [vmem:[#allocation3 + $0x8] sm:$0xff]
      %v253 = vld [vmem:[%s4] sm:$0xff]
      %v254 = vld [vmem:[%s4 + $0x8] sm:$0xff]
      %v255 = vld [vmem:[%s4 + $0x10] sm:$0xff]
      %v256 = vld [vmem:[%s4 + $0x18] sm:$0xff]
      %v257 = vld [vmem:[%s4 + $0x20] sm:$0xff]
      %v258 = vld [vmem:[%s4 + $0x28] sm:$0xff]
      %v259 = vld [vmem:[%s4 + $0x30] sm:$0xff]
      %v260 = vld [vmem:[%s4 + $0x38] sm:$0xff]
      %v261 = vld [vmem:[%s4 + $0x40] sm:$0xff]
      %v262 = vld [vmem:[%s4 + $0x48] sm:$0xff]
      %v263 = vld [vmem:[%s4 + $0x50] sm:$0xff]
      %v264 = vld [vmem:[%s4 + $0x58] sm:$0xff]
      %v265 = vld [vmem:[%s4 + $0x60] sm:$0xff]
      %v266 = vld [vmem:[%s4 + $0x68] sm:$0xff]
      %v267 = vld [vmem:[%s4 + $0x70] sm:$0xff]
      %v268 = vld [vmem:[%s4 + $0x78] sm:$0xff]
      %vm269 = vcmask 261120
      %v271 = vsel %vm269, %v251, 0
      %v274 = vsel %vm269, %v252, 0
      %v277 = vsel %vm269, %v253, 0
      %v280 = vsel %vm269, %v254, 0
      %v283 = vsel %vm269, %v255, 0
      %v286 = vsel %vm269, %v256, 0
      %v289 = vsel %vm269, %v257, 0
      %v292 = vsel %vm269, %v258, 0
      %v295 = vsel %vm269, %v259, 0
      %v298 = vsel %vm269, %v260, 0
      %v301 = vsel %vm269, %v261, 0
      %v304 = vsel %vm269, %v262, 0
      %v307 = vsel %vm269, %v263, 0
      %v310 = vsel %vm269, %v264, 0
      %v313 = vsel %vm269, %v265, 0
      %v316 = vsel %vm269, %v266, 0
      %v319 = vsel %vm269, %v267, 0
      %v322 = vsel %vm269, %v268, 0
      %324 = vmatprep.subr.mxu0 0.0
      %325 = vmatpush1.xpose.msra.mxu0 %v277
      %326 = vmatprep.subr.mxu0 0.0
      %327 = vmatpush1.xpose.msra.mxu0 %v280
      %328 = vmatprep.subr.mxu0 0.0
      %329 = vmatpush1.xpose.msra.mxu0 %v283
      %330 = vmatprep.subr.mxu0 0.0
      %331 = vmatpush1.xpose.msra.mxu0 %v286
      %332 = vmatprep.subr.mxu0 0.0
      %333 = vmatpush1.xpose.msra.mxu0 %v289
      %334 = vmatprep.subr.mxu0 0.0
      %335 = vmatpush1.xpose.msra.mxu0 %v292
      %336 = vmatprep.subr.mxu0 0.0
      %337 = vmatpush1.xpose.msra.mxu0 %v295
      %338 = vmatprep.subr.mxu0 0.0
      %339 = vmatpush1.xpose.msra.mxu0 %v298
      %340 = vmatprep.subr.mxu0 0.0
      %341 = vmatpush1.xpose.msra.mxu0 %v301
      %342 = vmatprep.subr.mxu0 0.0
      %343 = vmatpush1.xpose.msra.mxu0 %v304
      %344 = vmatprep.subr.mxu0 0.0
      %345 = vmatpush1.xpose.msra.mxu0 %v307
      %346 = vmatprep.subr.mxu0 0.0
      %347 = vmatpush1.xpose.msra.mxu0 %v310
      %348 = vmatprep.subr.mxu0 0.0
      %349 = vmatpush1.xpose.msra.mxu0 %v313
      %350 = vmatprep.subr.mxu0 0.0
      %351 = vmatpush1.xpose.msra.mxu0 %v316
      %352 = vmatprep.subr.mxu0 0.0
      %353 = vmatpush1.xpose.msra.mxu0 %v319
      %354 = vmatprep.subr.mxu0 0.0
      %355 = vmatpush1.xpose.msra.mxu0 %v322
      %356 = vmatprep.subr.mxu0 0.0
      %357 = vmatpush1.xpose.msra.mxu0 0.0
      %358 = vmatprep.subr.mxu0 0.0
      %359 = vmatpush1.xpose.msra.mxu0 0.0
      %360 = vmatprep.subr.mxu0 0.0
      %361 = vmatpush1.xpose.msra.mxu0 0.0
      %362 = vmatprep.subr.mxu0 0.0
      %363 = vmatpush1.xpose.msra.mxu0 0.0
      %364 = vmatprep.subr.mxu0 0.0
      %365 = vmatpush1.xpose.msra.mxu0 0.0
      %366 = vmatprep.subr.mxu0 0.0
      %367 = vmatpush1.xpose.msra.mxu0 0.0
      %368 = vmatprep.subr.mxu0 0.0
      %369 = vmatpush1.xpose.msra.mxu0 0.0
      %370 = vmatprep.subr.mxu0 0.0
      %371 = vmatpush1.xpose.msra.mxu0 0.0
      %372 = vmatprep.subr.mxu0 0.0
      %373 = vmatpush1.xpose.msra.mxu0 0.0
      %374 = vmatprep.subr.mxu0 0.0
      %375 = vmatpush1.xpose.msra.mxu0 0.0
      %376 = vmatprep.subr.mxu0 0.0
      %377 = vmatpush1.xpose.msra.mxu0 0.0
      %378 = vmatprep.subr.mxu0 0.0
      %379 = vmatpush1.xpose.msra.mxu0 0.0
      %380 = vmatprep.subr.mxu0 0.0
      %381 = vmatpush1.xpose.msra.mxu0 0.0
      %382 = vmatprep.subr.mxu0 0.0
      %383 = vmatpush1.xpose.msra.mxu0 0.0
      %384 = vmatprep.subr.mxu0 0.0
      %385 = vmatpush1.xpose.msra.mxu0 0.0
      %386 = vmatprep.subr.mxu0 0.0
      %387 = vmatpush1.xpose.msra.mxu0 0.0
      %388 = vmatprep.mubr.f32.mxu0 0.0
      %389 = vmatmul.mubr.f32.gmra.mrb[0].mxu0 %v271
      %v390 = vpop.f32.mrb[0].mxu0
      %v391 = vadd.f32 0.0, %v390
      %v392 = vpop.f32.mrb[0].mxu0
      %393 = vmatprep.mubr.f32.mxu0 0.0
      %394 = vmatmul.mubr.f32.gmra.mrb[0].mxu0 %v274
      %v395 = vpop.f32.mrb[0].mxu0
      %v396 = vadd.f32 0.0, %v395
      %v397 = vpop.f32.mrb[0].mxu0
      %398 = vdwg.mxu0
      %v399 = vadd.f32 %v249, %v391
      %v400 = vadd.f32 %v250, %v396
      %401 = vst [vmem:[#allocation7] sm:$0xff] %v399
      %402 = vst [vmem:[#allocation7 + $0x8] sm:$0xff] %v400
    $region41: #{tpu_custom_call.1} parent=1 // pred_fallthru
      _
    // Predicated region
    $region42: #{tpu_custom_call.1} parent=1 // pred_check
      _
    $region43: #{tpu_custom_call.1} parent=1 // pred_check_branch
      %404 = sbr.rel (0) target = $region45
    $region44: #{tpu_custom_call.1} parent=1 // pred_region
      %s406 = ssub.s32 256, 256
      %407 = vsyncadd [#allocation6], %s406
      %s408 = sshll.u32 [#allocation7], 4
      %s409 = int_to_ptr.vmem [resolvable:$true] %s408
      %414 = dma.vmem_to_hbm [thread:$0]  %s409, 256, %s5, [#allocation6], 128, 128, 8
    $region45: #{tpu_custom_call.1} parent=1 // pred_fallthru
      _
    // Predicated region
    $region46: #{tpu_custom_call.1} parent=1 // pred_check
      _
    $region47: #{tpu_custom_call.1} parent=1 // pred_check_branch
      %416 = sbr.rel (0) target = $region49
    $region48: #{tpu_custom_call.1} parent=1 // pred_region
      %417 = dma.done [#allocation6], 256
    $region49: #{tpu_custom_call.1} parent=1 // pred_fallthru
      _
    %418 = vsyncpa [#allocation5], 1
    %419 = vsyncpa [#allocation6], 1

</llo_original>
